<compile_context>
chip_gen: v7x
topology: tpu7x:2x2x1
jax: 0.10.0
libtpu: 0.0.40
codegen_flags: <defaults>
</compile_context>

<pallas_src>
import functools

import jax
import jax.numpy as jnp
from jax.experimental import pallas as pl
from jax.experimental.pallas import tpu as pltpu

# ---------------- scaled-down configuration ----------------
HIDDEN = 128          # stand-in for BERT hidden=768
NUM_HEADS = 4
HEAD_DIM = HIDDEN // NUM_HEADS
NUM_LAYERS = 2        # stand-in for 12
INTERMEDIATE = 256    # stand-in for 3072
VOCAB = 512           # stand-in for 30522
MAX_POS = 16
SEMANTIC_DIM = 64     # stand-in for 128
TRAINING_SNR = 12.0

BATCH = 2
SEQ = 8
VOCAB_TILE = 256      # lane-dense N tile for the vocab projection


def _full_spec(shape):
    """BlockSpec covering the whole array (block == array dims)."""
    n = len(shape)
    return pl.BlockSpec(shape, lambda *idx, n=n: (0,) * n)


# ---------------- Pallas kernels ----------------

def _layernorm_kernel(x_ref, g_ref, b_ref, o_ref):
    x = x_ref[...]
    mu = jnp.mean(x, axis=-1, keepdims=True)
    var = jnp.mean((x - mu) ** 2, axis=-1, keepdims=True)
    o_ref[...] = (x - mu) * jax.lax.rsqrt(var + 1e-12) * g_ref[...] + b_ref[...]


def layernorm(x, gamma, beta):
    M, D = x.shape
    return pl.pallas_call(
        _layernorm_kernel,
        out_shape=jax.ShapeDtypeStruct((M, D), jnp.float32),
        grid=(1,),
        in_specs=[_full_spec((M, D)), _full_spec((1, D)), _full_spec((1, D))],
        out_specs=_full_spec((M, D)),
    )(x, gamma, beta)


def _bert_layer_kernel(x_ref, mask_ref, wqkv_ref, bqkv_ref, wo_ref, bo_ref,
                       ln1_g_ref, ln1_b_ref, w1_ref, b1_ref, w2_ref, b2_ref,
                       ln2_g_ref, ln2_b_ref, o_ref, *, nheads, head_dim, scale):
    """Whole transformer layer fused: QKV -> attention -> proj -> add+LN -> FFN -> add+LN."""
    x = x_ref[...]                       # (M, H)   M = B*S
    M = x.shape[0]
    H = nheads * head_dim
    mask2d = mask_ref[...]               # (M, M) additive bias (block-diag over batches)

    # fused QKV projection: (M, H) @ (H, 3H)
    qkv = jnp.dot(x, wqkv_ref[...], preferred_element_type=jnp.float32) + bqkv_ref[...]

    # attention over all batches at once per head; output proj folded per head:
    #   ctx @ Wo == sum_h ctx_h @ Wo[h*Dh:(h+1)*Dh, :]
    attn = jnp.zeros((M, H), jnp.float32)
    for h in range(nheads):
        lo = h * head_dim
        hi = lo + head_dim
        qh = qkv[:, lo:hi]
        kh = qkv[:, H + lo:H + hi]
        vh = qkv[:, 2 * H + lo:2 * H + hi]
        s = jnp.dot(qh, kh.T, preferred_element_type=jnp.float32) * scale + mask2d
        p = jax.nn.softmax(s, axis=-1)
        ctx_h = jnp.dot(p, vh, preferred_element_type=jnp.float32)
        attn = attn + jnp.dot(ctx_h, wo_ref[lo:hi, :],
                              preferred_element_type=jnp.float32)
    attn = attn + bo_ref[...]

    # add + LayerNorm 1
    h1 = x + attn
    mu = jnp.mean(h1, axis=-1, keepdims=True)
    var = jnp.mean((h1 - mu) ** 2, axis=-1, keepdims=True)
    h1 = (h1 - mu) * jax.lax.rsqrt(var + 1e-12) * ln1_g_ref[...] + ln1_b_ref[...]

    # feed-forward (gelu)
    ff = jnp.dot(h1, w1_ref[...], preferred_element_type=jnp.float32) + b1_ref[...]
    ff = jax.nn.gelu(ff, approximate=True)   # tanh-approx gelu (~= BERT's erf gelu)
    ff = jnp.dot(ff, w2_ref[...], preferred_element_type=jnp.float32) + b2_ref[...]

    # add + LayerNorm 2
    h2 = h1 + ff
    mu2 = jnp.mean(h2, axis=-1, keepdims=True)
    var2 = jnp.mean((h2 - mu2) ** 2, axis=-1, keepdims=True)
    o_ref[...] = (h2 - mu2) * jax.lax.rsqrt(var2 + 1e-12) * ln2_g_ref[...] + ln2_b_ref[...]


def bert_layer(lp, x, mask2d):
    """x: (B*S, H) row-major; mask2d: (B*S, B*S) additive attention bias."""
    M, H = x.shape
    kernel = functools.partial(_bert_layer_kernel, nheads=NUM_HEADS,
                               head_dim=HEAD_DIM, scale=1.0 / (HEAD_DIM ** 0.5))
    args = (x, mask2d, lp["wqkv"], lp["bqkv"], lp["wo"], lp["bo"],
            lp["ln1_g"], lp["ln1_b"], lp["w1"], lp["b1"], lp["w2"], lp["b2"],
            lp["ln2_g"], lp["ln2_b"])
    return pl.pallas_call(
        kernel,
        out_shape=jax.ShapeDtypeStruct((M, H), jnp.float32),
        grid=(1,),
        in_specs=[_full_spec(a.shape) for a in args],
        out_specs=_full_spec((M, H)),
    )(*args)


def _channel_path_kernel(cls_ref, noise_ref, wf_ref, bf_ref, we_ref, be_ref,
                         wd_ref, bd_ref, wem_ref, bem_ref,
                         exp_ref, rec_ref, *, snr_linear):
    """feature proj -> tanh channel enc -> AWGN -> relu channel dec -> decoder embedding."""
    cls = cls_ref[...]                                                   # (B, H)
    sem = jnp.dot(cls, wf_ref[...], preferred_element_type=jnp.float32) + bf_ref[...]
    ch_in = jnp.tanh(jnp.dot(sem, we_ref[...],
                             preferred_element_type=jnp.float32) + be_ref[...])
    # AWGN: y = x + sqrt(mean(|x|^2)/snr_lin) * n    (global mean, matching the reference)
    signal_power = jnp.mean(ch_in * ch_in)
    noise_power = signal_power / snr_linear
    ch_out = ch_in + jnp.sqrt(noise_power) * noise_ref[...]
    rec = jnp.maximum(
        jnp.dot(ch_out, wd_ref[...], preferred_element_type=jnp.float32) + bd_ref[...], 0.0)
    rec_ref[...] = rec                                                   # (B, SEM)
    exp_ref[...] = jnp.dot(rec, wem_ref[...],
                           preferred_element_type=jnp.float32) + bem_ref[...]   # (B, H)


def channel_path(cls_embedding, noise, params, snr_db):
    B, H = cls_embedding.shape
    SEM = noise.shape[1]
    kernel = functools.partial(_channel_path_kernel,
                               snr_linear=10.0 ** (snr_db / 10.0))
    args = (cls_embedding, noise,
            params["feat_proj_w"], params["feat_proj_b"],
            params["ch_enc_w"], params["ch_enc_b"],
            params["ch_dec_w"], params["ch_dec_b"],
            params["dec_emb_w"], params["dec_emb_b"])
    expanded, recovered = pl.pallas_call(
        kernel,
        out_shape=(jax.ShapeDtypeStruct((B, H), jnp.float32),
                   jax.ShapeDtypeStruct((B, SEM), jnp.float32)),
        grid=(1,),
        in_specs=[_full_spec(a.shape) for a in args],
        out_specs=(_full_spec((B, H)), _full_spec((B, SEM))),
    )(*args)
    return expanded, recovered


def _vocab_proj_kernel(h_ref, e_ref, w_ref, b_ref, o_ref, *, batch, seq):
    # logits = (last_hidden + broadcast(expanded)) @ W + b
    #        =  last_hidden @ W + b  +  broadcast(expanded @ W)
    w = w_ref[...]
    hw = jnp.dot(h_ref[...], w, preferred_element_type=jnp.float32) + b_ref[...]   # (M, TN)
    ew = jnp.dot(e_ref[...], w, preferred_element_type=jnp.float32)                # (B, TN)
    for b in range(batch):
        o_ref[b * seq:(b + 1) * seq, :] = hw[b * seq:(b + 1) * seq, :] + ew[b:b + 1, :]


def vocab_projection(last_hidden_flat, expanded, w, b, batch, seq):
    """last_hidden_flat: (B*S, H); expanded: (B, H); w: (H, V); b: (1, V)."""
    M, H = last_hidden_flat.shape
    V = w.shape[1]
    TN = min(VOCAB_TILE, V)
    assert V % TN == 0
    kernel = functools.partial(_vocab_proj_kernel, batch=batch, seq=seq)
    out = pl.pallas_call(
        kernel,
        out_shape=jax.ShapeDtypeStruct((M, V), jnp.float32),
        grid=(V // TN,),
        in_specs=[
            pl.BlockSpec((M, H), lambda j: (0, 0)),
            pl.BlockSpec((batch, H), lambda j: (0, 0)),
            pl.BlockSpec((H, TN), lambda j: (0, j)),
            pl.BlockSpec((1, TN), lambda j: (0, j)),
        ],
        out_specs=pl.BlockSpec((M, TN), lambda j: (0, j)),
        compiler_params=pltpu.CompilerParams(dimension_semantics=("parallel",)),
    )(last_hidden_flat, expanded, w, b)
    return out.reshape(batch, seq, V)


# ---------------- BERT-like encoder (scaled down), built on the fused kernels ----------------

def init_bert_params(key, vocab_size, hidden, n_layers, intermediate, max_pos):
    def norm(k, shape, scale=0.02):
        return scale * jax.random.normal(k, shape, jnp.float32)

    keys = jax.random.split(key, 4 + n_layers)
    params = {
        "word_emb": norm(keys[0], (vocab_size, hidden)),
        "pos_emb": norm(keys[1], (max_pos, hidden)),
        "type_emb": norm(keys[2], (2, hidden)),
        "emb_ln_g": jnp.ones((1, hidden), jnp.float32),
        "emb_ln_b": jnp.zeros((1, hidden), jnp.float32),
        "layers": [],
    }
    for l in range(n_layers):
        lk = jax.random.split(keys[4 + l], 6)
        wq = norm(lk[0], (hidden, hidden))
        wk = norm(lk[1], (hidden, hidden))
        wv = norm(lk[2], (hidden, hidden))
        params["layers"].append({
            "wqkv": jnp.concatenate([wq, wk, wv], axis=1),        # fused QKV weight (H, 3H)
            "bqkv": jnp.zeros((1, 3 * hidden), jnp.float32),
            "wo": norm(lk[3], (hidden, hidden)),
            "bo": jnp.zeros((1, hidden), jnp.float32),
            "ln1_g": jnp.ones((1, hidden), jnp.float32),
            "ln1_b": jnp.zeros((1, hidden), jnp.float32),
            "w1": norm(lk[4], (hidden, intermediate)),
            "b1": jnp.zeros((1, intermediate), jnp.float32),
            "w2": norm(lk[5], (intermediate, hidden)),
            "b2": jnp.zeros((1, hidden), jnp.float32),
            "ln2_g": jnp.ones((1, hidden), jnp.float32),
            "ln2_b": jnp.zeros((1, hidden), jnp.float32),
        })
    return params


def bert_forward(p, input_ids, attention_mask):
    B, S = input_ids.shape
    # embeddings (gathers are plain-JAX glue)
    x = (p["word_emb"][input_ids]
         + p["pos_emb"][None, :S, :]
         + p["type_emb"][0][None, None, :])
    x = x.reshape(B * S, HIDDEN)
    x = layernorm(x, p["emb_ln_g"], p["emb_ln_b"])

    # block-diagonal additive attention mask over the flattened (B*S) rows:
    #   within-batch keys get the standard (1-mask)*-10000 bias,
    #   cross-batch keys get -1e9 (zero probability after softmax).
    mask_flat = attention_mask.astype(jnp.float32).reshape(B * S)
    key_bias = (1.0 - mask_flat) * -10000.0
    batch_ids = jnp.repeat(jnp.arange(B), S)
    same_batch = batch_ids[:, None] == batch_ids[None, :]
    mask2d = jnp.where(same_batch, key_bias[None, :], -1e9).astype(jnp.float32)

    for lp in p["layers"]:
        x = bert_layer(lp, x, mask2d)
    return x.reshape(B, S, HIDDEN)


# ---------------- SemanticCommunicationSystem ----------------

def init_system_params(key):
    ks = jax.random.split(key, 8)

    def norm(k, shape, scale=0.02):
        return scale * jax.random.normal(k, shape, jnp.float32)

    return {
        # SemanticEncoder: bert-base-uncased (synthetic) + Linear(768->SEMANTIC_DIM)
        "enc_bert": init_bert_params(ks[0], VOCAB, HIDDEN, NUM_LAYERS, INTERMEDIATE, MAX_POS),
        "feat_proj_w": norm(ks[1], (HIDDEN, SEMANTIC_DIM)),
        "feat_proj_b": jnp.zeros((1, SEMANTIC_DIM), jnp.float32),
        # ChannelEncoder: Linear + Tanh
        "ch_enc_w": norm(ks[2], (SEMANTIC_DIM, SEMANTIC_DIM)),
        "ch_enc_b": jnp.zeros((1, SEMANTIC_DIM), jnp.float32),
        # ChannelDecoder: Linear + ReLU
        "ch_dec_w": norm(ks[3], (SEMANTIC_DIM, SEMANTIC_DIM)),
        "ch_dec_b": jnp.zeros((1, SEMANTIC_DIM), jnp.float32),
        # SemanticDecoder: Linear(SEMANTIC_DIM->768) + bert-base-german-cased (synthetic)
        # + Linear(768->vocab)
        "dec_emb_w": norm(ks[4], (SEMANTIC_DIM, HIDDEN)),
        "dec_emb_b": jnp.zeros((1, HIDDEN), jnp.float32),
        "dec_bert": init_bert_params(ks[5], VOCAB, HIDDEN, NUM_LAYERS, INTERMEDIATE, MAX_POS),
        "vocab_w": norm(ks[6], (HIDDEN, VOCAB)),
        "vocab_b": jnp.zeros((1, VOCAB), jnp.float32),
    }


def semantic_communication_forward(params, src_input_ids, src_attention_mask,
                                   tgt_input_ids=None, tgt_attention_mask=None,
                                   snr_db=TRAINING_SNR, noise_key=None):
    # semantic encoder: BERT -> CLS token
    enc_hidden = bert_forward(params["enc_bert"], src_input_ids, src_attention_mask)
    cls_embedding = enc_hidden[:, 0]                                     # (B, H)

    # fused channel path: feature proj -> tanh enc -> AWGN -> relu dec -> decoder embedding
    # (standard-normal draw done host-side, torch.randn_like equivalent; mixing in-kernel)
    noise = jax.random.normal(noise_key, (cls_embedding.shape[0], SEMANTIC_DIM), jnp.float32)
    expanded_features, recovered_semantic = channel_path(
        cls_embedding, noise, params, snr_db)
    # TODO(synk): Rayleigh / Rician fading branches (channel='rayleigh'/'rician') not wired up.

    if tgt_input_ids is not None:
        dec_hidden = bert_forward(params["dec_bert"], tgt_input_ids, tgt_attention_mask)
        B, S, H = dec_hidden.shape
        logits = vocab_projection(dec_hidden.reshape(B * S, H), expanded_features,
                                  params["vocab_w"], params["vocab_b"], B, S)   # (B, S, V)
        return logits, recovered_semantic
    else:
        return expanded_features, recovered_semantic


# ---------------- main ----------------

if __name__ == "__main__":
    key = jax.random.PRNGKey(0)
    k_params, k_src, k_tgt, k_noise = jax.random.split(key, 4)

    params = init_system_params(k_params)

    src_input_ids = jax.random.randint(k_src, (BATCH, SEQ), 0, VOCAB, dtype=jnp.int32)
    src_attention_mask = jnp.ones((BATCH, SEQ), dtype=jnp.int32)
    tgt_input_ids = jax.random.randint(k_tgt, (BATCH, SEQ), 0, VOCAB, dtype=jnp.int32)
    tgt_attention_mask = jnp.ones((BATCH, SEQ), dtype=jnp.int32)

    logits, recovered = semantic_communication_forward(
        params, src_input_ids, src_attention_mask,
        tgt_input_ids, tgt_attention_mask,
        snr_db=TRAINING_SNR, noise_key=k_noise)

    jax.block_until_ready((logits, recovered))
    assert logits.shape == (BATCH, SEQ, VOCAB)
    assert recovered.shape == (BATCH, SEMANTIC_DIM)
    print("KERNEL_OK")
</pallas_src>

<mosaic_0001>
module attributes {stable_mosaic.version = 11 : i64} {
  func.func @_layernorm_kernel(%arg0: i32, %arg1: memref<16x128xf32, #tpu.memory_space<vmem>>, %arg2: memref<1x128xf32, #tpu.memory_space<vmem>>, %arg3: memref<1x128xf32, #tpu.memory_space<vmem>>, %arg4: memref<16x128xf32, #tpu.memory_space<vmem>>) attributes {dimension_semantics = [#tpu.dimension_semantics<arbitrary>], iteration_bounds = array<i64: 1>, scalar_prefetch = 0 : i64, scratch_operands = 0 : i64, tpu.core_type = #tpu.core_type<tc>, window_params = [{pipeline_mode = #tpu.pipeline_mode<synchronous>, transform_indices = @transform_0, window_bounds = array<i64: 16, 128>}, {pipeline_mode = #tpu.pipeline_mode<synchronous>, transform_indices = @transform_1, window_bounds = array<i64: 1, 128>}, {pipeline_mode = #tpu.pipeline_mode<synchronous>, transform_indices = @transform_2, window_bounds = array<i64: 1, 128>}, {pipeline_mode = #tpu.pipeline_mode<synchronous>, transform_indices = @transform_3, window_bounds = array<i64: 16, 128>}]} {
    %c0 = arith.constant 0 : index
    %c0_0 = arith.constant 0 : index
    %0 = vector.load %arg1[%c0, %c0_0] : memref<16x128xf32, #tpu.memory_space<vmem>>, vector<16x128xf32>
    %cst = arith.constant dense<0.000000e+00> : vector<16xf32>
    %1 = vector.multi_reduction <add>, %0, %cst [1] : vector<16x128xf32> to vector<16xf32>
    %2 = vector.shape_cast %1 : vector<16xf32> to vector<16x1xf32>
    %cst_1 = arith.constant 1.280000e+02 : f32
    %3 = vector.broadcast %cst_1 : f32 to vector<16x1xf32>
    %4 = arith.divf %2, %3 : vector<16x1xf32>
    %5 = vector.broadcast %4 : vector<16x1xf32> to vector<16x128xf32>
    %6 = arith.subf %0, %5 : vector<16x128xf32>
    %7 = arith.mulf %6, %6 : vector<16x128xf32>
    %cst_2 = arith.constant dense<0.000000e+00> : vector<16xf32>
    %8 = vector.multi_reduction <add>, %7, %cst_2 [1] : vector<16x128xf32> to vector<16xf32>
    %9 = vector.shape_cast %8 : vector<16xf32> to vector<16x1xf32>
    %cst_3 = arith.constant 1.280000e+02 : f32
    %10 = vector.broadcast %cst_3 : f32 to vector<16x1xf32>
    %11 = arith.divf %9, %10 : vector<16x1xf32>
    %12 = vector.broadcast %4 : vector<16x1xf32> to vector<16x128xf32>
    %13 = arith.subf %0, %12 : vector<16x128xf32>
    %cst_4 = arith.constant 9.99999996E-13 : f32
    %14 = vector.broadcast %cst_4 : f32 to vector<16x1xf32>
    %15 = arith.addf %11, %14 : vector<16x1xf32>
    %16 = math.rsqrt %15 : vector<16x1xf32>
    %17 = vector.broadcast %16 : vector<16x1xf32> to vector<16x128xf32>
    %18 = arith.mulf %13, %17 : vector<16x128xf32>
    %c0_5 = arith.constant 0 : index
    %c0_6 = arith.constant 0 : index
    %19 = vector.load %arg2[%c0_5, %c0_6] : memref<1x128xf32, #tpu.memory_space<vmem>>, vector<1x128xf32>
    %20 = vector.broadcast %19 : vector<1x128xf32> to vector<16x128xf32>
    %21 = arith.mulf %18, %20 : vector<16x128xf32>
    %c0_7 = arith.constant 0 : index
    %c0_8 = arith.constant 0 : index
    %22 = vector.load %arg3[%c0_7, %c0_8] : memref<1x128xf32, #tpu.memory_space<vmem>>, vector<1x128xf32>
    %23 = vector.broadcast %22 : vector<1x128xf32> to vector<16x128xf32>
    %24 = arith.addf %21, %23 : vector<16x128xf32>
    %c0_9 = arith.constant 0 : index
    %c0_10 = arith.constant 0 : index
    %25 = vector.load %arg4[%c0_9, %c0_10] : memref<16x128xf32, #tpu.memory_space<vmem>>, vector<16x128xf32>
    tpu.vector_store %arg4[%c0_9, %c0_10], %24 {strides = array<i32>} : memref<16x128xf32, #tpu.memory_space<vmem>>, vector<16x128xf32>,
    return
  }
  func.func @transform_0(%arg0: i32) -> (i32, i32) {
    %c0_i32 = arith.constant 0 : i32
    %c0_i32_0 = arith.constant 0 : i32
    %c0_i32_1 = arith.constant 0 : i32
    return %c0_i32, %c0_i32_0 : i32, i32
  }
  func.func @transform_1(%arg0: i32) -> (i32, i32) {
    %c0_i32 = arith.constant 0 : i32
    %c0_i32_0 = arith.constant 0 : i32
    %c0_i32_1 = arith.constant 0 : i32
    return %c0_i32, %c0_i32_0 : i32, i32
  }
  func.func @transform_2(%arg0: i32) -> (i32, i32) {
    %c0_i32 = arith.constant 0 : i32
    %c0_i32_0 = arith.constant 0 : i32
    %c0_i32_1 = arith.constant 0 : i32
    return %c0_i32, %c0_i32_0 : i32, i32
  }
  func.func @transform_3(%arg0: i32) -> (i32, i32) {
    %c0_i32 = arith.constant 0 : i32
    %c0_i32_0 = arith.constant 0 : i32
    %c0_i32_1 = arith.constant 0 : i32
    return %c0_i32, %c0_i32_0 : i32, i32
  }
}

</mosaic_0001>

<llo_original>
// kernel: tpu_custom_call.1
$region0: #{tpu_custom_call.1}
  #allocation0 [shape = 'u32[]', space=smem, size = 0x4, offset = 0x4, fixed_abs, tag = 'smem constant byte address 0x4 - core index']
  #allocation1 [shape = 'u32[144,128]{1,0:T(1,128)}', space=vmem, size = 0x12000, scoped, tag = 'internal scratch']
  %s0 = inlined_call_operand.hbm [shape: f32[16,128], index: 0, kind: input, shape index: {}]
  %s1 = inlined_call_operand.vmem [shape: f32[1,128], index: 1, kind: input, shape index: {}]
  %s2 = inlined_call_operand.vmem [shape: f32[1,128], index: 2, kind: input, shape index: {}]
  %s3 = inlined_call_operand.hbm [shape: f32[16,128], index: 3, kind: output, shape index: {}]
  %s4 = sld [smem:[#allocation0]]
  $region26: #{tpu_custom_call.1} parent=0
    _
  %s6 = ssub.s32 1, %s4
  %s7 = scalar_select 0, %s6, %s4
  $region1: #{tpu_custom_call.1} parent=0
    #allocation2 [shape = 'u8[8192]{0}', space=vmem, size = 0x2000, scoped, tag = 'input window, operand 0, single buffered']
    #allocation3 [shape = 's32[1]{0}', space=sflag, size = 0x4, scoped, tag = 'scoped memory for tpu_custom_call.1']
    #allocation4 [shape = 's32[1]{0}', space=sflag, size = 0x4, scoped, tag = 'scoped memory for tpu_custom_call.1']
    #allocation5 [shape = 'u8[8192]{0}', space=vmem, size = 0x2000, scoped, tag = 'output window, operand 0, single buffered']
    %8 = vsyncpa [#allocation3], 0
    %9 = vsyncpa [#allocation4], 0
    // Predicated region
    $region2: #{tpu_custom_call.1} parent=1 // pred_check
      _
    $region3: #{tpu_custom_call.1} parent=1 // pred_check_branch
      %11 = sbr.rel (0) target = $region5
    $region4: #{tpu_custom_call.1} parent=1 // pred_region
      %s13 = ssub.s32 256, 256
      %14 = vsyncadd [#allocation3], %s13
      %s15 = sshll.u32 [#allocation2], 4
      %s16 = int_to_ptr.vmem [resolvable:$true] %s15
      %21 = dma.hbm_to_vmem [thread:$0]  %s0, 256, %s16, [#allocation3], 128, 128, 8
    $region5: #{tpu_custom_call.1} parent=1 // pred_fallthru
      _
    // Predicated region
    $region6: #{tpu_custom_call.1} parent=1 // pred_check
      _
    $region7: #{tpu_custom_call.1} parent=1 // pred_check_branch
      %23 = sbr.rel (0) target = $region9
    $region8: #{tpu_custom_call.1} parent=1 // pred_region
      _
    $region9: #{tpu_custom_call.1} parent=1 // pred_fallthru
      _
    // Predicated region
    $region10: #{tpu_custom_call.1} parent=1 // pred_check
      _
    $region11: #{tpu_custom_call.1} parent=1 // pred_check_branch
      %25 = sbr.rel (0) target = $region13
    $region12: #{tpu_custom_call.1} parent=1 // pred_region
      _
    $region13: #{tpu_custom_call.1} parent=1 // pred_fallthru
      _
    // Predicated region
    $region14: #{tpu_custom_call.1} parent=1 // pred_check
      _
    $region15: #{tpu_custom_call.1} parent=1 // pred_check_branch
      %27 = sbr.rel (0) target = $region17
    $region16: #{tpu_custom_call.1} parent=1 // pred_region
      %28 = dma.done [#allocation3], 256
    $region17: #{tpu_custom_call.1} parent=1 // pred_fallthru
      _
    %v29 = vld [vmem:[#allocation2] sm:$0xff]
    %v30 = vld [vmem:[#allocation2 + $0x8] sm:$0xff]
    %31 = vadd.xlane.f32.xlu0 %v29
    %v32 = vpop.xlane.xlu0 %31
    %33 = vadd.xlane.f32.xlu0 %v30
    %v34 = vpop.xlane.xlu0 %33
    %v35 = vrcp.pop 128.0
    %v36 = vmul.f32 %v32, %v35
    %v37 = vmul.f32 %v34, %v35
    %v38 = vsub.f32 %v29, %v36
    %v39 = vsub.f32 %v30, %v37
    %v40 = vmul.f32 %v38, %v38
    %v41 = vmul.f32 %v39, %v39
    %42 = vadd.xlane.f32.xlu0 %v40
    %v43 = vpop.xlane.xlu0 %42
    %44 = vadd.xlane.f32.xlu0 %v41
    %v45 = vpop.xlane.xlu0 %44
    %v46 = vmul.f32 %v43, %v35
    %v47 = vmul.f32 %v45, %v35
    %v48 = vadd.f32 %v46, 1e-12
    %v49 = vadd.f32 %v47, 1e-12
    %v50 = vrsqrt.pop %v48
    %v51 = vrsqrt.pop %v49
    %v52 = vmul.f32 %v38, %v50
    %v53 = vmul.f32 %v39, %v51
    %v54 = vld [vmem:[%s1] sm:$0x1]
    %v56 = vlaneseq
    %v57 = vshrl.u32 %v56, 7
    %v58 = vsub.s32 0, %v57
    %v59 = vrot.slane %v54, %v58
    %v61 = vmul.f32 %v52, %v59
    %v62 = vmul.f32 %v53, %v59
    %v63 = vld [vmem:[%s2] sm:$0x1]
    %v65 = vlaneseq
    %v66 = vshrl.u32 %v65, 7
    %v67 = vsub.s32 0, %v66
    %v68 = vrot.slane %v63, %v67
    %v70 = vadd.f32 %v61, %v68
    %v71 = vadd.f32 %v62, %v68
    %72 = vst [vmem:[#allocation5] sm:$0xff] %v70
    %73 = vst [vmem:[#allocation5 + $0x8] sm:$0xff] %v71
    // Predicated region
    $region18: #{tpu_custom_call.1} parent=1 // pred_check
      _
    $region19: #{tpu_custom_call.1} parent=1 // pred_check_branch
      %75 = sbr.rel (0) target = $region21
    $region20: #{tpu_custom_call.1} parent=1 // pred_region
      %s77 = ssub.s32 256, 256
      %78 = vsyncadd [#allocation4], %s77
      %s79 = sshll.u32 [#allocation5], 4
      %s80 = int_to_ptr.vmem [resolvable:$true] %s79
      %85 = dma.vmem_to_hbm [thread:$0]  %s80, 256, %s3, [#allocation4], 128, 128, 8
    $region21: #{tpu_custom_call.1} parent=1 // pred_fallthru
      _
    // Predicated region
    $region22: #{tpu_custom_call.1} parent=1 // pred_check
      _
    $region23: #{tpu_custom_call.1} parent=1 // pred_check_branch
      %87 = sbr.rel (0) target = $region25
    $region24: #{tpu_custom_call.1} parent=1 // pred_region
      %88 = dma.done [#allocation4], 256
    $region25: #{tpu_custom_call.1} parent=1 // pred_fallthru
      _
    %89 = vsyncpa [#allocation3], 1
    %90 = vsyncpa [#allocation4], 1

</llo_original>
